<compile_context>
chip_gen: v5e
topology: v5e:2x2
jax: 0.10.0
libtpu: 0.0.40
codegen_flags: <defaults>
</compile_context>

<pallas_src>
import math
import numpy as np
import jax
import jax.numpy as jnp
from jax.experimental import pallas as pl
from jax.experimental.pallas import tpu as pltpu

# ---------------- configuration (small synthetic shapes) ----------------
B = 2          # batch
S = 8          # sequence length
E = 32         # embed_dim
H = 4          # num_heads
D = E // H     # head_dim
EPS = 1e-5     # nn.LayerNorm default eps
SCALE = 1.0 / math.sqrt(D)


def _gelu_exact(x):
    # PyTorch nn.GELU() default = exact erf formulation
    return 0.5 * x * (1.0 + jax.lax.erf(x / math.sqrt(2.0)))


def _layernorm(x, gamma, beta):
    mu = jnp.mean(x, axis=-1, keepdims=True)
    var = jnp.mean((x - mu) ** 2, axis=-1, keepdims=True)
    return (x - mu) * jax.lax.rsqrt(var + EPS) * gamma + beta


# ---------------- Pallas kernel (single invocation, no grid) ----------------
def attention_block_kernel(qc_ref, wqkv_ref, wo_ref, w1_ref, w2_ref, vec_ref,
                           out_ref):
    qc = qc_ref[...]                       # (B*S, 2E) = [q | context]
    q = qc[:, :E]                          # residual input

    # packed bias / LayerNorm slab: one (8, 3E) array instead of ten tiny ones
    vecs = vec_ref[...]
    bqkv = vecs[0:1, :]                    # (1, 3E)  (bq pre-scaled by 1/sqrt(D))
    b1   = vecs[1:2, :2 * E]
    bo   = vecs[2:3, :E]
    b2   = vecs[3:4, :E]
    g1   = vecs[4:5, :E]
    be1  = vecs[5:6, :E]
    g2   = vecs[6:7, :E]
    be2  = vecs[7:8, :E]

    # --- fused Q/K/V projection: one MXU push.  Block-diagonal weight keeps
    #     q -> Q and context -> K,V independent (general for context != q). ---
    qkv = jnp.dot(qc, wqkv_ref[...], preferred_element_type=jnp.float32) + bqkv
    qkv3 = qkv.reshape(B, S, 3 * E)        # (B, S, 3E)

    # --- attention: batched over B, static loop over heads.  Per-head output
    #     is folded directly through its slice of the output projection, so no
    #     lane-axis concatenate is needed. ---
    wo = wo_ref[...]                       # (E, E)
    mha = jnp.zeros((B * S, E), jnp.float32)
    for h in range(H):                     # H = 4, static
        lo = h * D
        qh = qkv3[:, :, lo:lo + D]                         # (B, S, D), pre-scaled
        kh = qkv3[:, :, E + lo:E + lo + D]                 # (B, S, D)
        vh = qkv3[:, :, 2 * E + lo:2 * E + lo + D]         # (B, S, D)
        s = jnp.einsum('bqd,bkd->bqk', qh, kh,
                       preferred_element_type=jnp.float32)  # (B, S, S)
        s = s - jnp.max(s, axis=-1, keepdims=True)
        p = jnp.exp(s)
        p = p * pl.reciprocal(jnp.sum(p, axis=-1, keepdims=True), approx=False)
        oh = jnp.einsum('bqk,bkd->bqd', p, vh,
                        preferred_element_type=jnp.float32)  # (B, S, D)
        mha = mha + jnp.dot(oh.reshape(B * S, D), wo[lo:lo + D, :],
                            preferred_element_type=jnp.float32)
    mha = mha + bo

    # --- residual + LayerNorm 1 (dropout = identity in eval) ---
    x = _layernorm(q + mha, g1, be1)

    # --- feed-forward: Linear(E,2E) -> GELU -> Linear(2E,E) ---
    h1 = jnp.dot(x, w1_ref[...], preferred_element_type=jnp.float32) + b1
    h1 = _gelu_exact(h1)
    ff = jnp.dot(h1, w2_ref[...], preferred_element_type=jnp.float32) + b2

    # --- residual + LayerNorm 2 ---
    out_ref[...] = _layernorm(x + ff, g2, be2).astype(out_ref.dtype)


def attention_forward(q, context, kp):
    """q, context: (B, S, E) float32.  kp: packed kernel params."""
    qf = q.reshape(B * S, E)
    cf = context.reshape(B * S, E)
    qc = jnp.concatenate([qf, cf], axis=-1)          # (B*S, 2E)

    vmem = pl.BlockSpec(memory_space=pltpu.MemorySpace.VMEM)
    out = pl.pallas_call(
        attention_block_kernel,
        out_shape=jax.ShapeDtypeStruct((B * S, E), jnp.float32),
        in_specs=[vmem] * 6,
        out_specs=vmem,
    )(qc, kp["w_qkv"], kp["wo_t"], kp["w1_t"], kp["w2_t"], kp["vecs"])
    return out.reshape(B, S, E)


# ---------------- pure-JAX reference (raw PyTorch-layout params) ----------------
def attention_reference(q, context, p):
    Q = q @ p["wq"].T + p["bq"]
    K = context @ p["wk"].T + p["bk"]
    V = context @ p["wv"].T + p["bv"]

    def split(x):  # (B,S,E) -> (B,H,S,D)
        return x.reshape(B, S, H, D).transpose(0, 2, 1, 3)

    Qh, Kh, Vh = split(Q), split(K), split(V)
    s = jnp.einsum("bhqd,bhkd->bhqk", Qh, Kh) * SCALE
    pattn = jax.nn.softmax(s, axis=-1)
    o = jnp.einsum("bhqk,bhkd->bhqd", pattn, Vh)
    o = o.transpose(0, 2, 1, 3).reshape(B, S, E)
    mha = o @ p["wo"].T + p["bo"]

    x = _layernorm(q + mha, p["g1"], p["be1"])
    h1 = _gelu_exact(x @ p["w1"].T + p["b1"])
    ff = h1 @ p["w2"].T + p["b2"]
    return _layernorm(x + ff, p["g2"], p["be2"])


# ---------------- parameter init (deterministic, synthetic) ----------------
def make_params(key):
    ks = jax.random.split(key, 12)
    scale = 0.1
    # nn.MultiheadAttention: in_proj_weight (3E, E), out_proj (E, E)
    in_proj_w = jax.random.normal(ks[0], (3 * E, E), jnp.float32) * scale
    in_proj_b = jax.random.normal(ks[1], (3 * E,), jnp.float32) * scale
    wo = jax.random.normal(ks[2], (E, E), jnp.float32) * scale
    bo = jax.random.normal(ks[3], (E,), jnp.float32) * scale
    # ff1: Linear(E, 2E) -> weight (2E, E); ff2: Linear(2E, E) -> weight (E, 2E)
    w1 = jax.random.normal(ks[4], (2 * E, E), jnp.float32) * scale
    b1 = jax.random.normal(ks[5], (2 * E,), jnp.float32) * scale
    w2 = jax.random.normal(ks[6], (E, 2 * E), jnp.float32) * scale
    b2 = jax.random.normal(ks[7], (E,), jnp.float32) * scale
    # non-trivial LayerNorm affines to exercise the packed slab
    g1 = 1.0 + 0.1 * jax.random.normal(ks[8], (E,), jnp.float32)
    be1 = 0.1 * jax.random.normal(ks[9], (E,), jnp.float32)
    g2 = 1.0 + 0.1 * jax.random.normal(ks[10], (E,), jnp.float32)
    be2 = 0.1 * jax.random.normal(ks[11], (E,), jnp.float32)

    return {
        "wq": in_proj_w[:E], "wk": in_proj_w[E:2 * E], "wv": in_proj_w[2 * E:],
        "bq": in_proj_b[:E], "bk": in_proj_b[E:2 * E], "bv": in_proj_b[2 * E:],
        "wo": wo, "bo": bo, "w1": w1, "b1": b1, "w2": w2, "b2": b2,
        "g1": g1, "be1": be1, "g2": g2, "be2": be2,
    }


def pack_kernel_params(p):
    # block-diagonal fused projection weight: [q | ctx] @ W -> [Q*scale | K | V]
    w_qkv = jnp.zeros((2 * E, 3 * E), jnp.float32)
    w_qkv = w_qkv.at[:E, :E].set(p["wq"].T * SCALE)        # scale folded into Wq
    w_qkv = w_qkv.at[E:, E:2 * E].set(p["wk"].T)
    w_qkv = w_qkv.at[E:, 2 * E:].set(p["wv"].T)

    bqkv = jnp.concatenate([p["bq"] * SCALE, p["bk"], p["bv"]])   # (3E,)

    # single slab holding all small vectors (one DMA instead of ten)
    vecs = jnp.zeros((8, 3 * E), jnp.float32)
    vecs = vecs.at[0, :].set(bqkv)
    vecs = vecs.at[1, :2 * E].set(p["b1"])
    vecs = vecs.at[2, :E].set(p["bo"])
    vecs = vecs.at[3, :E].set(p["b2"])
    vecs = vecs.at[4, :E].set(p["g1"])
    vecs = vecs.at[5, :E].set(p["be1"])
    vecs = vecs.at[6, :E].set(p["g2"])
    vecs = vecs.at[7, :E].set(p["be2"])

    return {
        "w_qkv": w_qkv,
        "wo_t": p["wo"].T,
        "w1_t": p["w1"].T,
        "w2_t": p["w2"].T,
        "vecs": vecs,
    }


if __name__ == "__main__":
    key = jax.random.PRNGKey(0)
    kq, kp = jax.random.split(key, 2)
    q = jax.random.normal(kq, (B, S, E), jnp.float32)
    context = q  # module default: forward(q) with context=None -> context = q

    raw = make_params(kp)
    packed = pack_kernel_params(raw)

    out = attention_forward(q, context, packed)
    out = jax.block_until_ready(out)

    ref = attention_reference(q, context, raw)
    np.testing.assert_allclose(np.asarray(out), np.asarray(ref),
                               rtol=1e-4, atol=1e-4)

    print("KERNEL_OK")
</pallas_src>

<mosaic_0001>
module attributes {stable_mosaic.version = 11 : i64} {
  func.func @attention_block_kernel(%arg0: memref<16x64xf32, #tpu.memory_space<vmem>>, %arg1: memref<64x96xf32, #tpu.memory_space<vmem>>, %arg2: memref<32x32xf32, #tpu.memory_space<vmem>>, %arg3: memref<32x64xf32, #tpu.memory_space<vmem>>, %arg4: memref<64x32xf32, #tpu.memory_space<vmem>>, %arg5: memref<8x96xf32, #tpu.memory_space<vmem>>, %arg6: memref<16x32xf32, #tpu.memory_space<vmem>>) attributes {dimension_semantics = [], scalar_prefetch = 0 : i64, scratch_operands = 0 : i64, tpu.core_type = #tpu.core_type<tc>} {
    %c0 = arith.constant 0 : index
    %c0_0 = arith.constant 0 : index
    %0 = vector.load %arg0[%c0, %c0_0] : memref<16x64xf32, #tpu.memory_space<vmem>>, vector<16x64xf32>
    %1 = vector.extract_strided_slice %0 {offsets = [0, 0], sizes = [16, 32], strides = [1, 1]} : vector<16x64xf32> to vector<16x32xf32>
    %c0_1 = arith.constant 0 : index
    %c0_2 = arith.constant 0 : index
    %2 = vector.load %arg5[%c0_1, %c0_2] : memref<8x96xf32, #tpu.memory_space<vmem>>, vector<8x96xf32>
    %3 = vector.extract_strided_slice %2 {offsets = [0, 0], sizes = [1, 96], strides = [1, 1]} : vector<8x96xf32> to vector<1x96xf32>
    %4 = vector.extract_strided_slice %2 {offsets = [1, 0], sizes = [1, 64], strides = [1, 1]} : vector<8x96xf32> to vector<1x64xf32>
    %5 = vector.extract_strided_slice %2 {offsets = [2, 0], sizes = [1, 32], strides = [1, 1]} : vector<8x96xf32> to vector<1x32xf32>
    %6 = vector.extract_strided_slice %2 {offsets = [3, 0], sizes = [1, 32], strides = [1, 1]} : vector<8x96xf32> to vector<1x32xf32>
    %7 = vector.extract_strided_slice %2 {offsets = [4, 0], sizes = [1, 32], strides = [1, 1]} : vector<8x96xf32> to vector<1x32xf32>
    %8 = vector.extract_strided_slice %2 {offsets = [5, 0], sizes = [1, 32], strides = [1, 1]} : vector<8x96xf32> to vector<1x32xf32>
    %9 = vector.extract_strided_slice %2 {offsets = [6, 0], sizes = [1, 32], strides = [1, 1]} : vector<8x96xf32> to vector<1x32xf32>
    %10 = vector.extract_strided_slice %2 {offsets = [7, 0], sizes = [1, 32], strides = [1, 1]} : vector<8x96xf32> to vector<1x32xf32>
    %c0_3 = arith.constant 0 : index
    %c0_4 = arith.constant 0 : index
    %11 = vector.load %arg1[%c0_3, %c0_4] : memref<64x96xf32, #tpu.memory_space<vmem>>, vector<64x96xf32>
    %cst = arith.constant dense<0.000000e+00> : vector<16x96xf32>
    %12 = tpu.matmul %0, %11, %cst {dimension_numbers = #tpu.dot_dimension_numbers<[1], [0], [0], [1], [0, 0, 1, 1], [], []>} : vector<16x64xf32>, vector<64x96xf32>, vector<16x96xf32> -> vector<16x96xf32>
    %13 = vector.broadcast %3 : vector<1x96xf32> to vector<16x96xf32>
    %14 = arith.addf %12, %13 : vector<16x96xf32>
    %15 = vector.shape_cast %14 : vector<16x96xf32> to vector<2x8x96xf32>
    %c0_5 = arith.constant 0 : index
    %c0_6 = arith.constant 0 : index
    %16 = vector.load %arg2[%c0_5, %c0_6] : memref<32x32xf32, #tpu.memory_space<vmem>>, vector<32x32xf32>
    %cst_7 = arith.constant 0.000000e+00 : f32
    %17 = vector.broadcast %cst_7 : f32 to vector<16x32xf32>
    %18 = vector.extract_strided_slice %15 {offsets = [0, 0, 0], sizes = [2, 8, 8], strides = [1, 1, 1]} : vector<2x8x96xf32> to vector<2x8x8xf32>
    %19 = vector.extract_strided_slice %15 {offsets = [0, 0, 32], sizes = [2, 8, 8], strides = [1, 1, 1]} : vector<2x8x96xf32> to vector<2x8x8xf32>
    %20 = vector.extract_strided_slice %15 {offsets = [0, 0, 64], sizes = [2, 8, 8], strides = [1, 1, 1]} : vector<2x8x96xf32> to vector<2x8x8xf32>
    "tpu.trace_start"() <{level = 10 : i32, message = "bqd,bkd->bqk"}> : () -> ()
    %cst_8 = arith.constant dense<0.000000e+00> : vector<2x8x8xf32>
    %21 = tpu.matmul %18, %19, %cst_8 {dimension_numbers = #tpu.dot_dimension_numbers<[2], [2], [1], [1], [0, 0, 0, 1, 1, 1], [0], [0]>} : vector<2x8x8xf32>, vector<2x8x8xf32>, vector<2x8x8xf32> -> vector<2x8x8xf32>
    "tpu.trace_stop"() : () -> ()
    %cst_9 = arith.constant dense<0xFF800000> : vector<2x8xf32>
    %22 = vector.multi_reduction <maximumf>, %21, %cst_9 [2] : vector<2x8x8xf32> to vector<2x8xf32>
    %23 = vector.shape_cast %22 : vector<2x8xf32> to vector<2x8x1xf32>
    %24 = vector.broadcast %23 : vector<2x8x1xf32> to vector<2x8x8xf32>
    %25 = arith.subf %21, %24 : vector<2x8x8xf32>
    %26 = math.exp %25 : vector<2x8x8xf32>
    %cst_10 = arith.constant dense<0.000000e+00> : vector<2x8xf32>
    %27 = vector.multi_reduction <add>, %26, %cst_10 [2] : vector<2x8x8xf32> to vector<2x8xf32>
    %28 = vector.shape_cast %27 : vector<2x8xf32> to vector<2x8x1xf32>
    %29 = tpu.reciprocal %28 : vector<2x8x1xf32> -> vector<2x8x1xf32>
    %30 = vector.broadcast %29 : vector<2x8x1xf32> to vector<2x8x8xf32>
    %31 = arith.mulf %26, %30 : vector<2x8x8xf32>
    "tpu.trace_start"() <{level = 10 : i32, message = "bqk,bkd->bqd"}> : () -> ()
    %cst_11 = arith.constant dense<0.000000e+00> : vector<2x8x8xf32>
    %32 = tpu.matmul %31, %20, %cst_11 {dimension_numbers = #tpu.dot_dimension_numbers<[2], [1], [1], [2], [0, 0, 0, 1, 1, 2], [0], [0]>} : vector<2x8x8xf32>, vector<2x8x8xf32>, vector<2x8x8xf32> -> vector<2x8x8xf32>
    "tpu.trace_stop"() : () -> ()
    %33 = vector.shape_cast %32 : vector<2x8x8xf32> to vector<16x8xf32>
    %34 = vector.extract_strided_slice %16 {offsets = [0, 0], sizes = [8, 32], strides = [1, 1]} : vector<32x32xf32> to vector<8x32xf32>
    %cst_12 = arith.constant dense<0.000000e+00> : vector<16x32xf32>
    %35 = tpu.matmul %33, %34, %cst_12 {dimension_numbers = #tpu.dot_dimension_numbers<[1], [0], [0], [1], [0, 0, 1, 1], [], []>} : vector<16x8xf32>, vector<8x32xf32>, vector<16x32xf32> -> vector<16x32xf32>
    %36 = arith.addf %17, %35 : vector<16x32xf32>
    %37 = vector.extract_strided_slice %15 {offsets = [0, 0, 8], sizes = [2, 8, 8], strides = [1, 1, 1]} : vector<2x8x96xf32> to vector<2x8x8xf32>
    %38 = vector.extract_strided_slice %15 {offsets = [0, 0, 40], sizes = [2, 8, 8], strides = [1, 1, 1]} : vector<2x8x96xf32> to vector<2x8x8xf32>
    %39 = vector.extract_strided_slice %15 {offsets = [0, 0, 72], sizes = [2, 8, 8], strides = [1, 1, 1]} : vector<2x8x96xf32> to vector<2x8x8xf32>
    "tpu.trace_start"() <{level = 10 : i32, message = "bqd,bkd->bqk"}> : () -> ()
    %cst_13 = arith.constant dense<0.000000e+00> : vector<2x8x8xf32>
    %40 = tpu.matmul %37, %38, %cst_13 {dimension_numbers = #tpu.dot_dimension_numbers<[2], [2], [1], [1], [0, 0, 0, 1, 1, 1], [0], [0]>} : vector<2x8x8xf32>, vector<2x8x8xf32>, vector<2x8x8xf32> -> vector<2x8x8xf32>
    "tpu.trace_stop"() : () -> ()
    %cst_14 = arith.constant dense<0xFF800000> : vector<2x8xf32>
    %41 = vector.multi_reduction <maximumf>, %40, %cst_14 [2] : vector<2x8x8xf32> to vector<2x8xf32>
    %42 = vector.shape_cast %41 : vector<2x8xf32> to vector<2x8x1xf32>
    %43 = vector.broadcast %42 : vector<2x8x1xf32> to vector<2x8x8xf32>
    %44 = arith.subf %40, %43 : vector<2x8x8xf32>
    %45 = math.exp %44 : vector<2x8x8xf32>
    %cst_15 = arith.constant dense<0.000000e+00> : vector<2x8xf32>
    %46 = vector.multi_reduction <add>, %45, %cst_15 [2] : vector<2x8x8xf32> to vector<2x8xf32>
    %47 = vector.shape_cast %46 : vector<2x8xf32> to vector<2x8x1xf32>
    %48 = tpu.reciprocal %47 : vector<2x8x1xf32> -> vector<2x8x1xf32>
    %49 = vector.broadcast %48 : vector<2x8x1xf32> to vector<2x8x8xf32>
    %50 = arith.mulf %45, %49 : vector<2x8x8xf32>
    "tpu.trace_start"() <{level = 10 : i32, message = "bqk,bkd->bqd"}> : () -> ()
    %cst_16 = arith.constant dense<0.000000e+00> : vector<2x8x8xf32>
    %51 = tpu.matmul %50, %39, %cst_16 {dimension_numbers = #tpu.dot_dimension_numbers<[2], [1], [1], [2], [0, 0, 0, 1, 1, 2], [0], [0]>} : vector<2x8x8xf32>, vector<2x8x8xf32>, vector<2x8x8xf32> -> vector<2x8x8xf32>
    "tpu.trace_stop"() : () -> ()
    %52 = vector.shape_cast %51 : vector<2x8x8xf32> to vector<16x8xf32>
    %53 = vector.extract_strided_slice %16 {offsets = [8, 0], sizes = [8, 32], strides = [1, 1]} : vector<32x32xf32> to vector<8x32xf32>
    %cst_17 = arith.constant dense<0.000000e+00> : vector<16x32xf32>
    %54 = tpu.matmul %52, %53, %cst_17 {dimension_numbers = #tpu.dot_dimension_numbers<[1], [0], [0], [1], [0, 0, 1, 1], [], []>} : vector<16x8xf32>, vector<8x32xf32>, vector<16x32xf32> -> vector<16x32xf32>
    %55 = arith.addf %36, %54 : vector<16x32xf32>
    %56 = vector.extract_strided_slice %15 {offsets = [0, 0, 16], sizes = [2, 8, 8], strides = [1, 1, 1]} : vector<2x8x96xf32> to vector<2x8x8xf32>
    %57 = vector.extract_strided_slice %15 {offsets = [0, 0, 48], sizes = [2, 8, 8], strides = [1, 1, 1]} : vector<2x8x96xf32> to vector<2x8x8xf32>
    %58 = vector.extract_strided_slice %15 {offsets = [0, 0, 80], sizes = [2, 8, 8], strides = [1, 1, 1]} : vector<2x8x96xf32> to vector<2x8x8xf32>
    "tpu.trace_start"() <{level = 10 : i32, message = "bqd,bkd->bqk"}> : () -> ()
    %cst_18 = arith.constant dense<0.000000e+00> : vector<2x8x8xf32>
    %59 = tpu.matmul %56, %57, %cst_18 {dimension_numbers = #tpu.dot_dimension_numbers<[2], [2], [1], [1], [0, 0, 0, 1, 1, 1], [0], [0]>} : vector<2x8x8xf32>, vector<2x8x8xf32>, vector<2x8x8xf32> -> vector<2x8x8xf32>
    "tpu.trace_stop"() : () -> ()
    %cst_19 = arith.constant dense<0xFF800000> : vector<2x8xf32>
    %60 = vector.multi_reduction <maximumf>, %59, %cst_19 [2] : vector<2x8x8xf32> to vector<2x8xf32>
    %61 = vector.shape_cast %60 : vector<2x8xf32> to vector<2x8x1xf32>
    %62 = vector.broadcast %61 : vector<2x8x1xf32> to vector<2x8x8xf32>
    %63 = arith.subf %59, %62 : vector<2x8x8xf32>
    %64 = math.exp %63 : vector<2x8x8xf32>
    %cst_20 = arith.constant dense<0.000000e+00> : vector<2x8xf32>
    %65 = vector.multi_reduction <add>, %64, %cst_20 [2] : vector<2x8x8xf32> to vector<2x8xf32>
    %66 = vector.shape_cast %65 : vector<2x8xf32> to vector<2x8x1xf32>
    %67 = tpu.reciprocal %66 : vector<2x8x1xf32> -> vector<2x8x1xf32>
    %68 = vector.broadcast %67 : vector<2x8x1xf32> to vector<2x8x8xf32>
    %69 = arith.mulf %64, %68 : vector<2x8x8xf32>
    "tpu.trace_start"() <{level = 10 : i32, message = "bqk,bkd->bqd"}> : () -> ()
    %cst_21 = arith.constant dense<0.000000e+00> : vector<2x8x8xf32>
    %70 = tpu.matmul %69, %58, %cst_21 {dimension_numbers = #tpu.dot_dimension_numbers<[2], [1], [1], [2], [0, 0, 0, 1, 1, 2], [0], [0]>} : vector<2x8x8xf32>, vector<2x8x8xf32>, vector<2x8x8xf32> -> vector<2x8x8xf32>
    "tpu.trace_stop"() : () -> ()
    %71 = vector.shape_cast %70 : vector<2x8x8xf32> to vector<16x8xf32>
    %72 = vector.extract_strided_slice %16 {offsets = [16, 0], sizes = [8, 32], strides = [1, 1]} : vector<32x32xf32> to vector<8x32xf32>
    %cst_22 = arith.constant dense<0.000000e+00> : vector<16x32xf32>
    %73 = tpu.matmul %71, %72, %cst_22 {dimension_numbers = #tpu.dot_dimension_numbers<[1], [0], [0], [1], [0, 0, 1, 1], [], []>} : vector<16x8xf32>, vector<8x32xf32>, vector<16x32xf32> -> vector<16x32xf32>
    %74 = arith.addf %55, %73 : vector<16x32xf32>
    %75 = vector.extract_strided_slice %15 {offsets = [0, 0, 24], sizes = [2, 8, 8], strides = [1, 1, 1]} : vector<2x8x96xf32> to vector<2x8x8xf32>
    %76 = vector.extract_strided_slice %15 {offsets = [0, 0, 56], sizes = [2, 8, 8], strides = [1, 1, 1]} : vector<2x8x96xf32> to vector<2x8x8xf32>
    %77 = vector.extract_strided_slice %15 {offsets = [0, 0, 88], sizes = [2, 8, 8], strides = [1, 1, 1]} : vector<2x8x96xf32> to vector<2x8x8xf32>
    "tpu.trace_start"() <{level = 10 : i32, message = "bqd,bkd->bqk"}> : () -> ()
    %cst_23 = arith.constant dense<0.000000e+00> : vector<2x8x8xf32>
    %78 = tpu.matmul %75, %76, %cst_23 {dimension_numbers = #tpu.dot_dimension_numbers<[2], [2], [1], [1], [0, 0, 0, 1, 1, 1], [0], [0]>} : vector<2x8x8xf32>, vector<2x8x8xf32>, vector<2x8x8xf32> -> vector<2x8x8xf32>
    "tpu.trace_stop"() : () -> ()
    %cst_24 = arith.constant dense<0xFF800000> : vector<2x8xf32>
    %79 = vector.multi_reduction <maximumf>, %78, %cst_24 [2] : vector<2x8x8xf32> to vector<2x8xf32>
    %80 = vector.shape_cast %79 : vector<2x8xf32> to vector<2x8x1xf32>
    %81 = vector.broadcast %80 : vector<2x8x1xf32> to vector<2x8x8xf32>
    %82 = arith.subf %78, %81 : vector<2x8x8xf32>
    %83 = math.exp %82 : vector<2x8x8xf32>
    %cst_25 = arith.constant dense<0.000000e+00> : vector<2x8xf32>
    %84 = vector.multi_reduction <add>, %83, %cst_25 [2] : vector<2x8x8xf32> to vector<2x8xf32>
    %85 = vector.shape_cast %84 : vector<2x8xf32> to vector<2x8x1xf32>
    %86 = tpu.reciprocal %85 : vector<2x8x1xf32> -> vector<2x8x1xf32>
    %87 = vector.broadcast %86 : vector<2x8x1xf32> to vector<2x8x8xf32>
    %88 = arith.mulf %83, %87 : vector<2x8x8xf32>
    "tpu.trace_start"() <{level = 10 : i32, message = "bqk,bkd->bqd"}> : () -> ()
    %cst_26 = arith.constant dense<0.000000e+00> : vector<2x8x8xf32>
    %89 = tpu.matmul %88, %77, %cst_26 {dimension_numbers = #tpu.dot_dimension_numbers<[2], [1], [1], [2], [0, 0, 0, 1, 1, 2], [0], [0]>} : vector<2x8x8xf32>, vector<2x8x8xf32>, vector<2x8x8xf32> -> vector<2x8x8xf32>
    "tpu.trace_stop"() : () -> ()
    %90 = vector.shape_cast %89 : vector<2x8x8xf32> to vector<16x8xf32>
    %91 = vector.extract_strided_slice %16 {offsets = [24, 0], sizes = [8, 32], strides = [1, 1]} : vector<32x32xf32> to vector<8x32xf32>
    %cst_27 = arith.constant dense<0.000000e+00> : vector<16x32xf32>
    %92 = tpu.matmul %90, %91, %cst_27 {dimension_numbers = #tpu.dot_dimension_numbers<[1], [0], [0], [1], [0, 0, 1, 1], [], []>} : vector<16x8xf32>, vector<8x32xf32>, vector<16x32xf32> -> vector<16x32xf32>
    %93 = arith.addf %74, %92 : vector<16x32xf32>
    %94 = vector.broadcast %5 : vector<1x32xf32> to vector<16x32xf32>
    %95 = arith.addf %93, %94 : vector<16x32xf32>
    %96 = arith.addf %1, %95 : vector<16x32xf32>
    %cst_28 = arith.constant dense<0.000000e+00> : vector<16xf32>
    %97 = vector.multi_reduction <add>, %96, %cst_28 [1] : vector<16x32xf32> to vector<16xf32>
    %98 = vector.shape_cast %97 : vector<16xf32> to vector<16x1xf32>
    %cst_29 = arith.constant 3.200000e+01 : f32
    %99 = vector.broadcast %cst_29 : f32 to vector<16x1xf32>
    %100 = arith.divf %98, %99 : vector<16x1xf32>
    %101 = vector.broadcast %100 : vector<16x1xf32> to vector<16x32xf32>
    %102 = arith.subf %96, %101 : vector<16x32xf32>
    %103 = arith.mulf %102, %102 : vector<16x32xf32>
    %cst_30 = arith.constant dense<0.000000e+00> : vector<16xf32>
    %104 = vector.multi_reduction <add>, %103, %cst_30 [1] : vector<16x32xf32> to vector<16xf32>
    %105 = vector.shape_cast %104 : vector<16xf32> to vector<16x1xf32>
    %cst_31 = arith.constant 3.200000e+01 : f32
    %106 = vector.broadcast %cst_31 : f32 to vector<16x1xf32>
    %107 = arith.divf %105, %106 : vector<16x1xf32>
    %108 = vector.broadcast %100 : vector<16x1xf32> to vector<16x32xf32>
    %109 = arith.subf %96, %108 : vector<16x32xf32>
    %cst_32 = arith.constant 9.99999974E-6 : f32
    %110 = vector.broadcast %cst_32 : f32 to vector<16x1xf32>
    %111 = arith.addf %107, %110 : vector<16x1xf32>
    %112 = math.rsqrt %111 : vector<16x1xf32>
    %113 = vector.broadcast %112 : vector<16x1xf32> to vector<16x32xf32>
    %114 = arith.mulf %109, %113 : vector<16x32xf32>
    %115 = vector.broadcast %7 : vector<1x32xf32> to vector<16x32xf32>
    %116 = arith.mulf %114, %115 : vector<16x32xf32>
    %117 = vector.broadcast %8 : vector<1x32xf32> to vector<16x32xf32>
    %118 = arith.addf %116, %117 : vector<16x32xf32>
    %c0_33 = arith.constant 0 : index
    %c0_34 = arith.constant 0 : index
    %119 = vector.load %arg3[%c0_33, %c0_34] : memref<32x64xf32, #tpu.memory_space<vmem>>, vector<32x64xf32>
    %cst_35 = arith.constant dense<0.000000e+00> : vector<16x64xf32>
    %120 = tpu.matmul %118, %119, %cst_35 {dimension_numbers = #tpu.dot_dimension_numbers<[1], [0], [0], [1], [0, 0, 1, 1], [], []>} : vector<16x32xf32>, vector<32x64xf32>, vector<16x64xf32> -> vector<16x64xf32>
    %121 = vector.broadcast %4 : vector<1x64xf32> to vector<16x64xf32>
    %122 = arith.addf %120, %121 : vector<16x64xf32>
    %cst_36 = arith.constant 5.000000e-01 : f32
    %123 = vector.broadcast %cst_36 : f32 to vector<16x64xf32>
    %124 = arith.mulf %123, %122 : vector<16x64xf32>
    %cst_37 = arith.constant 1.41421354 : f32
    %125 = vector.broadcast %cst_37 : f32 to vector<16x64xf32>
    %126 = arith.divf %122, %125 : vector<16x64xf32>
    %127 = math.erf %126 : vector<16x64xf32>
    %cst_38 = arith.constant 1.000000e+00 : f32
    %128 = vector.broadcast %cst_38 : f32 to vector<16x64xf32>
    %129 = arith.addf %128, %127 : vector<16x64xf32>
    %130 = arith.mulf %124, %129 : vector<16x64xf32>
    %c0_39 = arith.constant 0 : index
    %c0_40 = arith.constant 0 : index
    %131 = vector.load %arg4[%c0_39, %c0_40] : memref<64x32xf32, #tpu.memory_space<vmem>>, vector<64x32xf32>
    %cst_41 = arith.constant dense<0.000000e+00> : vector<16x32xf32>
    %132 = tpu.matmul %130, %131, %cst_41 {dimension_numbers = #tpu.dot_dimension_numbers<[1], [0], [0], [1], [0, 0, 1, 1], [], []>} : vector<16x64xf32>, vector<64x32xf32>, vector<16x32xf32> -> vector<16x32xf32>
    %133 = vector.broadcast %6 : vector<1x32xf32> to vector<16x32xf32>
    %134 = arith.addf %132, %133 : vector<16x32xf32>
    %135 = arith.addf %118, %134 : vector<16x32xf32>
    %cst_42 = arith.constant dense<0.000000e+00> : vector<16xf32>
    %136 = vector.multi_reduction <add>, %135, %cst_42 [1] : vector<16x32xf32> to vector<16xf32>
    %137 = vector.shape_cast %136 : vector<16xf32> to vector<16x1xf32>
    %cst_43 = arith.constant 3.200000e+01 : f32
    %138 = vector.broadcast %cst_43 : f32 to vector<16x1xf32>
    %139 = arith.divf %137, %138 : vector<16x1xf32>
    %140 = vector.broadcast %139 : vector<16x1xf32> to vector<16x32xf32>
    %141 = arith.subf %135, %140 : vector<16x32xf32>
    %142 = arith.mulf %141, %141 : vector<16x32xf32>
    %cst_44 = arith.constant dense<0.000000e+00> : vector<16xf32>
    %143 = vector.multi_reduction <add>, %142, %cst_44 [1] : vector<16x32xf32> to vector<16xf32>
    %144 = vector.shape_cast %143 : vector<16xf32> to vector<16x1xf32>
    %cst_45 = arith.constant 3.200000e+01 : f32
    %145 = vector.broadcast %cst_45 : f32 to vector<16x1xf32>
    %146 = arith.divf %144, %145 : vector<16x1xf32>
    %147 = vector.broadcast %139 : vector<16x1xf32> to vector<16x32xf32>
    %148 = arith.subf %135, %147 : vector<16x32xf32>
    %cst_46 = arith.constant 9.99999974E-6 : f32
    %149 = vector.broadcast %cst_46 : f32 to vector<16x1xf32>
    %150 = arith.addf %146, %149 : vector<16x1xf32>
    %151 = math.rsqrt %150 : vector<16x1xf32>
    %152 = vector.broadcast %151 : vector<16x1xf32> to vector<16x32xf32>
    %153 = arith.mulf %148, %152 : vector<16x32xf32>
    %154 = vector.broadcast %9 : vector<1x32xf32> to vector<16x32xf32>
    %155 = arith.mulf %153, %154 : vector<16x32xf32>
    %156 = vector.broadcast %10 : vector<1x32xf32> to vector<16x32xf32>
    %157 = arith.addf %155, %156 : vector<16x32xf32>
    %c0_47 = arith.constant 0 : index
    %c0_48 = arith.constant 0 : index
    %158 = vector.load %arg6[%c0_47, %c0_48] : memref<16x32xf32, #tpu.memory_space<vmem>>, vector<16x32xf32>
    tpu.vector_store %arg6[%c0_47, %c0_48], %157 {strides = array<i32>} : memref<16x32xf32, #tpu.memory_space<vmem>>, vector<16x32xf32>,
    return
  }
}

</mosaic_0001>

<llo_original>
// kernel: tpu_custom_call.1
$region0: #{tpu_custom_call.1}
  #allocation0 [shape = 'u32[]', space=smem, size = 0x4, offset = 0x4, fixed_abs, tag = 'smem constant byte address 0x4 - core index']
  #allocation1 [shape = 'u32[72,128]{1,0:T(1,128)}', space=vmem, size = 0x9000, scoped, tag = 'internal scratch']
  %s0 = inlined_call_operand.hbm [shape: f32[16,64], index: 0, kind: input, shape index: {}]
  %s1 = inlined_call_operand.vmem [shape: f32[64,96], index: 1, kind: input, shape index: {}]
  %s2 = inlined_call_operand.vmem [shape: f32[32,32], index: 2, kind: input, shape index: {}]
  %s3 = inlined_call_operand.hbm [shape: f32[32,64], index: 3, kind: input, shape index: {}]
  %s4 = inlined_call_operand.vmem [shape: f32[64,32], index: 4, kind: input, shape index: {}]
  %s5 = inlined_call_operand.hbm [shape: f32[8,96], index: 5, kind: input, shape index: {}]
  %s6 = inlined_call_operand.hbm [shape: f32[16,32], index: 6, kind: output, shape index: {}]
  %s7 = sld [smem:[#allocation0]]
  $region46: #{tpu_custom_call.1} parent=0
    _
  %s9 = ssub.s32 1, %s7
  %s10 = scalar_select 0, %s9, %s7
  $region1: #{tpu_custom_call.1} parent=0
    #allocation2 [shape = 'u8[8192]{0}', space=vmem, size = 0x2000, scoped, tag = 'input window, operand 0, single buffered']
    #allocation3 [shape = 's32[1]{0}', space=sflag, size = 0x4, scoped, tag = 'scoped memory for tpu_custom_call.1']
    #allocation4 [shape = 's32[1]{0}', space=sflag, size = 0x4, scoped, tag = 'scoped memory for tpu_custom_call.1']
    #allocation5 [shape = 'u8[16384]{0}', space=vmem, size = 0x4000, scoped, tag = 'input window, operand 3, single buffered']
    #allocation6 [shape = 's32[1]{0}', space=sflag, size = 0x4, scoped, tag = 'scoped memory for tpu_custom_call.1']
    #allocation7 [shape = 'u8[4096]{0}', space=vmem, size = 0x1000, scoped, tag = 'input window, operand 5, single buffered']
    #allocation8 [shape = 'u8[8192]{0}', space=vmem, size = 0x2000, scoped, tag = 'output window, operand 0, single buffered']
    %11 = vsyncpa [#allocation3], 0
    %12 = vsyncpa [#allocation6], 0
    %13 = vsyncpa [#allocation4], 0
    // Predicated region
    $region2: #{tpu_custom_call.1} parent=1 // pred_check
      _
    $region3: #{tpu_custom_call.1} parent=1 // pred_check_branch
      %15 = sbr.rel (0) target = $region5
    $region4: #{tpu_custom_call.1} parent=1 // pred_region
      %17 = vsyncadd [#allocation3], 0
      %s18 = sshll.u32 %s0, 4
      %s19 = int_to_ptr.hbm [resolvable:$true] %s18
      %s20 = sshll.u32 [#allocation2], 4
      %s21 = int_to_ptr.vmem [resolvable:$true] %s20
      %26 = dma.hbm_to_vmem [thread:$0]  %s19, 256, %s21, [#allocation3], 128, 128, 8
    $region5: #{tpu_custom_call.1} parent=1 // pred_fallthru
      _
    // Predicated region
    $region6: #{tpu_custom_call.1} parent=1 // pred_check
      _
    $region7: #{tpu_custom_call.1} parent=1 // pred_check_branch
      %28 = sbr.rel (0) target = $region9
    $region8: #{tpu_custom_call.1} parent=1 // pred_region
      _
    $region9: #{tpu_custom_call.1} parent=1 // pred_fallthru
      _
    // Predicated region
    $region10: #{tpu_custom_call.1} parent=1 // pred_check
      _
    $region11: #{tpu_custom_call.1} parent=1 // pred_check_branch
      %30 = sbr.rel (0) target = $region13
    $region12: #{tpu_custom_call.1} parent=1 // pred_region
      _
    $region13: #{tpu_custom_call.1} parent=1 // pred_fallthru
      _
    // Predicated region
    $region14: #{tpu_custom_call.1} parent=1 // pred_check
      _
    $region15: #{tpu_custom_call.1} parent=1 // pred_check_branch
      %32 = sbr.rel (0) target = $region17
    $region16: #{tpu_custom_call.1} parent=1 // pred_region
      %34 = vsyncadd [#allocation6], 0
      %s35 = sshll.u32 %s3, 4
      %s36 = int_to_ptr.hbm [resolvable:$true] %s35
      %s37 = sshll.u32 [#allocation5], 4
      %s38 = int_to_ptr.vmem [resolvable:$true] %s37
      %43 = dma.hbm_to_vmem [thread:$0]  %s36, 512, %s38, [#allocation6], 128, 128, 8
    $region17: #{tpu_custom_call.1} parent=1 // pred_fallthru
      _
    // Predicated region
    $region18: #{tpu_custom_call.1} parent=1 // pred_check
      _
    $region19: #{tpu_custom_call.1} parent=1 // pred_check_branch
      %45 = sbr.rel (0) target = $region21
    $region20: #{tpu_custom_call.1} parent=1 // pred_region
      _
    $region21: #{tpu_custom_call.1} parent=1 // pred_fallthru
      _
    // Predicated region
    $region22: #{tpu_custom_call.1} parent=1 // pred_check
      _
    $region23: #{tpu_custom_call.1} parent=1 // pred_check_branch
      %47 = sbr.rel (0) target = $region25
    $region24: #{tpu_custom_call.1} parent=1 // pred_region
      %49 = vsyncadd [#allocation6], 0
      %s51 = sshll.u32 %s5, 4
      %s52 = int_to_ptr.hbm [resolvable:$true] %s51
      %s53 = sshll.u32 [#allocation7], 4
      %s54 = int_to_ptr.vmem [resolvable:$true] %s53
      %56 = dma.hbm_to_vmem [thread:$0]  %s52, 128, %s54, [#allocation6]
    $region25: #{tpu_custom_call.1} parent=1 // pred_fallthru
      _
    // Predicated region
    $region26: #{tpu_custom_call.1} parent=1 // pred_check
      _
    $region27: #{tpu_custom_call.1} parent=1 // pred_check_branch
      %58 = sbr.rel (0) target = $region29
    $region28: #{tpu_custom_call.1} parent=1 // pred_region
      %60 = dma.done [#allocation3], 256
    $region29: #{tpu_custom_call.1} parent=1 // pred_fallthru
      _
    // Predicated region
    $region30: #{tpu_custom_call.1} parent=1 // pred_check
      _
    $region31: #{tpu_custom_call.1} parent=1 // pred_check_branch
      %62 = sbr.rel (0) target = $region33
    $region32: #{tpu_custom_call.1} parent=1 // pred_region
      %64 = dma.done [#allocation6], 512
    $region33: #{tpu_custom_call.1} parent=1 // pred_fallthru
      _
    // Predicated region
    $region34: #{tpu_custom_call.1} parent=1 // pred_check
      _
    $region35: #{tpu_custom_call.1} parent=1 // pred_check_branch
      %66 = sbr.rel (0) target = $region37
    $region36: #{tpu_custom_call.1} parent=1 // pred_region
      %68 = dma.done [#allocation6], 128
    $region37: #{tpu_custom_call.1} parent=1 // pred_fallthru
      _
    %v69 = vld [vmem:[#allocation2] sm:$0xff]
    %v70 = vld [vmem:[#allocation2 + $0x8] sm:$0xff]
    %v71 = vld [vmem:[#allocation7] sm:$0xff]
    %v72 = vld [vmem:[%s1] sm:$0xff]
    %v73 = vld [vmem:[%s1 + $0x8] sm:$0xff]
    %v74 = vld [vmem:[%s1 + $0x10] sm:$0xff]
    %v75 = vld [vmem:[%s1 + $0x18] sm:$0xff]
    %v76 = vld [vmem:[%s1 + $0x20] sm:$0xff]
    %v77 = vld [vmem:[%s1 + $0x28] sm:$0xff]
    %v78 = vld [vmem:[%s1 + $0x30] sm:$0xff]
    %v79 = vld [vmem:[%s1 + $0x38] sm:$0xff]
    %v80 = vperm.slane %v71, 0
    %vm81 = vcmask 523264
    %v83 = vsel %vm81, %v69, 0
    %v86 = vsel %vm81, %v70, 0
    %88 = vmatpush.msra.mxu0 0.0
    %89 = vmatpush.msra.mxu0 0.0
    %90 = vmatpush.msra.mxu0 0.0
    %91 = vmatpush.msra.mxu0 0.0
    %92 = vmatpush.msra.mxu0 0.0
    %93 = vmatpush.msra.mxu0 0.0
    %94 = vmatpush.msra.mxu0 0.0
    %95 = vmatpush.msra.mxu0 0.0
    %96 = vmatpush.msra.mxu0 %v79
    %97 = vmatpush.msra.mxu0 %v78
    %98 = vmatpush.msra.mxu0 %v77
    %99 = vmatpush.msra.mxu0 %v76
    %100 = vmatpush.msra.mxu0 %v75
    %101 = vmatpush.msra.mxu0 %v74
    %102 = vmatpush.msra.mxu0 %v73
    %103 = vmatpush.msra.mxu0 %v72
    %104 = vmatmul.f32.gmra.mxu0 %v83
    %v105 = vpop.f32.mrf.mxu0
    %v106 = vadd.f32 %v80, %v105
    %107 = vmatmul.f32.gmra.mxu0 %v86
    %v108 = vpop.f32.mrf.mxu0
    %v109 = vadd.f32 %v80, %v108
    %110 = vdwg.mxu0
    %v111 = vld [vmem:[%s2] sm:$0xff]
    %v112 = vld [vmem:[%s2 + $0x8] sm:$0xff]
    %v113 = vld [vmem:[%s2 + $0x10] sm:$0xff]
    %v114 = vld [vmem:[%s2 + $0x18] sm:$0xff]
    %116 = vrot.lane.b32.xlu0 %v106, 96
    %v117 = vpop.permute.xlu0 %116
    %vm118 = vcmask 64512
    %v119 = vsel %vm118, %v106, 0
    %v121 = vsel %vm118, %v117, 0
    %123 = vmatpush.xpose.msra.mxu0 0.0
    %124 = vmatpush.xpose.msra.mxu0 0.0
    %125 = vmatpush.xpose.msra.mxu0 0.0
    %126 = vmatpush.xpose.msra.mxu0 0.0
    %127 = vmatpush.xpose.msra.mxu0 0.0
    %128 = vmatpush.xpose.msra.mxu0 0.0
    %129 = vmatpush.xpose.msra.mxu0 0.0
    %130 = vmatpush.xpose.msra.mxu0 0.0
    %131 = vmatpush.xpose.msra.mxu0 0.0
    %132 = vmatpush.xpose.msra.mxu0 0.0
    %133 = vmatpush.xpose.msra.mxu0 0.0
    %134 = vmatpush.xpose.msra.mxu0 0.0
    %135 = vmatpush.xpose.msra.mxu0 0.0
    %136 = vmatpush.xpose.msra.mxu0 0.0
    %137 = vmatpush.xpose.msra.mxu0 0.0
    %138 = vmatpush.xpose.msra.mxu0 %v121
    %139 = vmatmul.f32.gmra.mxu0 %v119
    %v140 = vpop.f32.mrf.mxu0
    %v141 = vadd.f32 0.0, %v140
    %142 = vdwg.mxu0
    %144 = vrot.lane.b32.xlu0 %v109, 96
    %v145 = vpop.permute.xlu0 %144
    %v146 = vsel %vm118, %v109, 0
    %v148 = vsel %vm118, %v145, 0
    %150 = vmatpush.xpose.msra.mxu0 0.0
    %151 = vmatpush.xpose.msra.mxu0 0.0
    %152 = vmatpush.xpose.msra.mxu0 0.0
    %153 = vmatpush.xpose.msra.mxu0 0.0
    %154 = vmatpush.xpose.msra.mxu0 0.0
    %155 = vmatpush.xpose.msra.mxu0 0.0
    %156 = vmatpush.xpose.msra.mxu0 0.0
    %157 = vmatpush.xpose.msra.mxu0 0.0
    %158 = vmatpush.xpose.msra.mxu0 0.0
    %159 = vmatpush.xpose.msra.mxu0 0.0
    %160 = vmatpush.xpose.msra.mxu0 0.0
    %161 = vmatpush.xpose.msra.mxu0 0.0
    %162 = vmatpush.xpose.msra.mxu0 0.0
    %163 = vmatpush.xpose.msra.mxu0 0.0
    %164 = vmatpush.xpose.msra.mxu0 0.0
    %165 = vmatpush.xpose.msra.mxu0 %v148
    %166 = vmatmul.f32.gmra.mxu0 %v146
    %v167 = vpop.f32.mrf.mxu0
    %v168 = vadd.f32 0.0, %v167
    %169 = vdwg.mxu0
    %v170 = vsel %vm118, %v141, -inf
    %171 = vmax.xlane.f32.xlu0 %v170
    %v172 = vpop.xlane.xlu0 %171
    %v173 = vsel %vm118, %v168, -inf
    %174 = vmax.xlane.f32.xlu0 %v173
    %v175 = vpop.xlane.xlu0 %174
    %v176 = vsub.f32 %v141, %v172
    %v177 = vsub.f32 %v168, %v175
    %v178 = vmul.f32 %v176, 1.442695
    %v179 = vpow.pop %v178
    %v180 = vmul.f32 %v177, 1.442695
    %v181 = vpow.pop %v180
    %v182 = vsel %vm118, %v179, 0.0
    %183 = vadd.xlane.f32.xlu0 %v182
    %v184 = vpop.xlane.xlu0 %183
    %v185 = vsel %vm118, %v181, 0.0
    %186 = vadd.xlane.f32.xlu0 %v185
    %v187 = vpop.xlane.xlu0 %186
    %v188 = vrcp.pop %v184
    %v189 = vmul.f32 %v184, %v188
    %v190 = vsub.f32 1.0, %v189
    %v191 = vmul.f32 %v188, %v190
    %v192 = vadd.f32 %v188, %v191
    %vm193 = vweird.f32 %v184
    %vm194 = vweird.f32 %v188
    %vm195 = vmor %vm193, %vm194
    %v196 = vsel %vm195, %v188, %v192
    %v197 = vand.u32 2147483647, %v184
    %vm198 = vcmp.eq.f32.partialorder %v197, 8.507059e+37
    %v199 = vand.u32 %v184, 2147483648
    %v200 = vor.u32 1.1754944e-38, %v199
    %v201 = vsel %vm198, %v200, %v196
    %v202 = vrcp.pop %v187
    %v203 = vmul.f32 %v187, %v202
    %v204 = vsub.f32 1.0, %v203
    %v205 = vmul.f32 %v202, %v204
    %v206 = vadd.f32 %v202, %v205
    %vm207 = vweird.f32 %v187
    %vm208 = vweird.f32 %v202
    %vm209 = vmor %vm207, %vm208
    %v210 = vsel %vm209, %v202, %v206
    %v211 = vand.u32 2147483647, %v187
    %vm212 = vcmp.eq.f32.partialorder %v211, 8.507059e+37
    %v213 = vand.u32 %v187, 2147483648
    %v214 = vor.u32 1.1754944e-38, %v213
    %v215 = vsel %vm212, %v214, %v210
    %v216 = vmul.f32 %v179, %v201
    %v217 = vmul.f32 %v181, %v215
    %218 = vrot.lane.b32.xlu0 %v106, 64
    %v219 = vpop.permute.xlu0 %218
    %v222 = vsel %vm118, %v216, 0
    %224 = vmatpush.msra.mxu0 0.0
    %225 = vmatpush.msra.mxu0 0.0
    %226 = vmatpush.msra.mxu0 0.0
    %227 = vmatpush.msra.mxu0 0.0
    %228 = vmatpush.msra.mxu0 0.0
    %229 = vmatpush.msra.mxu0 0.0
    %230 = vmatpush.msra.mxu0 0.0
    %231 = vmatpush.msra.mxu0 0.0
    %232 = vmatpush.msra.mxu0 0.0
    %233 = vmatpush.msra.mxu0 0.0
    %234 = vmatpush.msra.mxu0 0.0
    %235 = vmatpush.msra.mxu0 0.0
    %236 = vmatpush.msra.mxu0 0.0
    %237 = vmatpush.msra.mxu0 0.0
    %238 = vmatpush.msra.mxu0 0.0
    %239 = vmatpush.msra.mxu0 %v219
    %240 = vmatmul.f32.gmra.mxu0 %v222
    %v241 = vpop.f32.mrf.mxu0
    %v242 = vadd.f32 0.0, %v241
    %243 = vdwg.mxu0
    %244 = vrot.lane.b32.xlu0 %v109, 64
    %v245 = vpop.permute.xlu0 %244
    %v248 = vsel %vm118, %v217, 0
    %250 = vmatpush.msra.mxu0 0.0
    %251 = vmatpush.msra.mxu0 0.0
    %252 = vmatpush.msra.mxu0 0.0
    %253 = vmatpush.msra.mxu0 0.0
    %254 = vmatpush.msra.mxu0 0.0
    %255 = vmatpush.msra.mxu0 0.0
    %256 = vmatpush.msra.mxu0 0.0
    %257 = vmatpush.msra.mxu0 0.0
    %258 = vmatpush.msra.mxu0 0.0
    %259 = vmatpush.msra.mxu0 0.0
    %260 = vmatpush.msra.mxu0 0.0
    %261 = vmatpush.msra.mxu0 0.0
    %262 = vmatpush.msra.mxu0 0.0
    %263 = vmatpush.msra.mxu0 0.0
    %264 = vmatpush.msra.mxu0 0.0
    %265 = vmatpush.msra.mxu0 %v245
    %266 = vmatmul.f32.gmra.mxu0 %v248
    %v267 = vpop.f32.mrf.mxu0
    %v268 = vadd.f32 0.0, %v267
    %269 = vdwg.mxu0
    %270 = vrot.lane.b32.xlu0 %v106, 120
    %v271 = vpop.permute.xlu0 %270
    %272 = vrot.lane.b32.xlu0 %v106, 88
    %v273 = vpop.permute.xlu0 %272
    %v274 = vsel %vm118, %v271, 0
    %v276 = vsel %vm118, %v273, 0
    %278 = vmatpush.xpose.msra.mxu0 0.0
    %279 = vmatpush.xpose.msra.mxu0 0.0
    %280 = vmatpush.xpose.msra.mxu0 0.0
    %281 = vmatpush.xpose.msra.mxu0 0.0
    %282 = vmatpush.xpose.msra.mxu0 0.0
    %283 = vmatpush.xpose.msra.mxu0 0.0
    %284 = vmatpush.xpose.msra.mxu0 0.0
    %285 = vmatpush.xpose.msra.mxu0 0.0
    %286 = vmatpush.xpose.msra.mxu0 0.0
    %287 = vmatpush.xpose.msra.mxu0 0.0
    %288 = vmatpush.xpose.msra.mxu0 0.0
    %289 = vmatpush.xpose.msra.mxu0 0.0
    %290 = vmatpush.xpose.msra.mxu0 0.0
    %291 = vmatpush.xpose.msra.mxu0 0.0
    %292 = vmatpush.xpose.msra.mxu0 0.0
    %293 = vmatpush.xpose.msra.mxu0 %v276
    %294 = vmatmul.f32.gmra.mxu0 %v274
    %v295 = vpop.f32.mrf.mxu0
    %v296 = vadd.f32 0.0, %v295
    %297 = vdwg.mxu0
    %298 = vrot.lane.b32.xlu0 %v109, 120
    %v299 = vpop.permute.xlu0 %298
    %300 = vrot.lane.b32.xlu0 %v109, 88
    %v301 = vpop.permute.xlu0 %300
    %v302 = vsel %vm118, %v299, 0
    %v304 = vsel %vm118, %v301, 0
    %306 = vmatpush.xpose.msra.mxu0 0.0
    %307 = vmatpush.xpose.msra.mxu0 0.0
    %308 = vmatpush.xpose.msra.mxu0 0.0
    %309 = vmatpush.xpose.msra.mxu0 0.0
    %310 = vmatpush.xpose.msra.mxu0 0.0
    %311 = vmatpush.xpose.msra.mxu0 0.0
    %312 = vmatpush.xpose.msra.mxu0 0.0
    %313 = vmatpush.xpose.msra.mxu0 0.0
    %314 = vmatpush.xpose.msra.mxu0 0.0
    %315 = vmatpush.xpose.msra.mxu0 0.0
    %316 = vmatpush.xpose.msra.mxu0 0.0
    %317 = vmatpush.xpose.msra.mxu0 0.0
    %318 = vmatpush.xpose.msra.mxu0 0.0
    %319 = vmatpush.xpose.msra.mxu0 0.0
    %320 = vmatpush.xpose.msra.mxu0 0.0
    %321 = vmatpush.xpose.msra.mxu0 %v304
    %322 = vmatmul.f32.gmra.mxu0 %v302
    %v323 = vpop.f32.mrf.mxu0
    %v324 = vadd.f32 0.0, %v323
    %325 = vdwg.mxu0
    %v326 = vsel %vm118, %v296, -inf
    %327 = vmax.xlane.f32.xlu0 %v326
    %v328 = vpop.xlane.xlu0 %327
    %v329 = vsel %vm118, %v324, -inf
    %330 = vmax.xlane.f32.xlu0 %v329
    %v331 = vpop.xlane.xlu0 %330
    %v332 = vsub.f32 %v296, %v328
    %v333 = vsub.f32 %v324, %v331
    %v334 = vmul.f32 %v332, 1.442695
    %v335 = vpow.pop %v334
    %v336 = vmul.f32 %v333, 1.442695
    %v337 = vpow.pop %v336
    %v338 = vsel %vm118, %v335, 0.0
    %339 = vadd.xlane.f32.xlu0 %v338
    %v340 = vpop.xlane.xlu0 %339
    %v341 = vsel %vm118, %v337, 0.0
    %342 = vadd.xlane.f32.xlu0 %v341
    %v343 = vpop.xlane.xlu0 %342
    %v344 = vrcp.pop %v340
    %v345 = vmul.f32 %v340, %v344
    %v346 = vsub.f32 1.0, %v345
    %v347 = vmul.f32 %v344, %v346
    %v348 = vadd.f32 %v344, %v347
    %vm349 = vweird.f32 %v340
    %vm350 = vweird.f32 %v344
    %vm351 = vmor %vm349, %vm350
    %v352 = vsel %vm351, %v344, %v348
    %v353 = vand.u32 2147483647, %v340
    %vm354 = vcmp.eq.f32.partialorder %v353, 8.507059e+37
    %v355 = vand.u32 %v340, 2147483648
    %v356 = vor.u32 1.1754944e-38, %v355
    %v357 = vsel %vm354, %v356, %v352
    %v358 = vrcp.pop %v343
    %v359 = vmul.f32 %v343, %v358
    %v360 = vsub.f32 1.0, %v359
    %v361 = vmul.f32 %v358, %v360
    %v362 = vadd.f32 %v358, %v361
    %vm363 = vweird.f32 %v343
    %vm364 = vweird.f32 %v358
    %vm365 = vmor %vm363, %vm364
    %v366 = vsel %vm365, %v358, %v362
    %v367 = vand.u32 2147483647, %v343
    %vm368 = vcmp.eq.f32.partialorder %v367, 8.507059e+37
    %v369 = vand.u32 %v343, 2147483648
    %v370 = vor.u32 1.1754944e-38, %v369
    %v371 = vsel %vm368, %v370, %v366
    %v372 = vmul.f32 %v335, %v357
    %v373 = vmul.f32 %v337, %v371
    %374 = vrot.lane.b32.xlu0 %v106, 56
    %v375 = vpop.permute.xlu0 %374
    %v378 = vsel %vm118, %v372, 0
    %380 = vmatpush.msra.mxu0 0.0
    %381 = vmatpush.msra.mxu0 0.0
    %382 = vmatpush.msra.mxu0 0.0
    %383 = vmatpush.msra.mxu0 0.0
    %384 = vmatpush.msra.mxu0 0.0
    %385 = vmatpush.msra.mxu0 0.0
    %386 = vmatpush.msra.mxu0 0.0
    %387 = vmatpush.msra.mxu0 0.0
    %388 = vmatpush.msra.mxu0 0.0
    %389 = vmatpush.msra.mxu0 0.0
    %390 = vmatpush.msra.mxu0 0.0
    %391 = vmatpush.msra.mxu0 0.0
    %392 = vmatpush.msra.mxu0 0.0
    %393 = vmatpush.msra.mxu0 0.0
    %394 = vmatpush.msra.mxu0 0.0
    %395 = vmatpush.msra.mxu0 %v375
    %396 = vmatmul.f32.gmra.mxu0 %v378
    %v397 = vpop.f32.mrf.mxu0
    %v398 = vadd.f32 0.0, %v397
    %399 = vdwg.mxu0
    %400 = vrot.lane.b32.xlu0 %v109, 56
    %v401 = vpop.permute.xlu0 %400
    %v404 = vsel %vm118, %v373, 0
    %406 = vmatpush.msra.mxu0 0.0
    %407 = vmatpush.msra.mxu0 0.0
    %408 = vmatpush.msra.mxu0 0.0
    %409 = vmatpush.msra.mxu0 0.0
    %410 = vmatpush.msra.mxu0 0.0
    %411 = vmatpush.msra.mxu0 0.0
    %412 = vmatpush.msra.mxu0 0.0
    %413 = vmatpush.msra.mxu0 0.0
    %414 = vmatpush.msra.mxu0 0.0
    %415 = vmatpush.msra.mxu0 0.0
    %416 = vmatpush.msra.mxu0 0.0
    %417 = vmatpush.msra.mxu0 0.0
    %418 = vmatpush.msra.mxu0 0.0
    %419 = vmatpush.msra.mxu0 0.0
    %420 = vmatpush.msra.mxu0 0.0
    %421 = vmatpush.msra.mxu0 %v401
    %422 = vmatmul.f32.gmra.mxu0 %v404
    %v423 = vpop.f32.mrf.mxu0
    %v424 = vadd.f32 0.0, %v423
    %425 = vdwg.mxu0
    %v427 = vsel %vm118, %v398, 0
    %v430 = vsel %vm118, %v424, 0
    %432 = vmatpush.msra.mxu0 0.0
    %433 = vmatpush.msra.mxu0 0.0
    %434 = vmatpush.msra.mxu0 0.0
    %435 = vmatpush.msra.mxu0 0.0
    %436 = vmatpush.msra.mxu0 0.0
    %437 = vmatpush.msra.mxu0 0.0
    %438 = vmatpush.msra.mxu0 0.0
    %439 = vmatpush.msra.mxu0 0.0
    %440 = vmatpush.msra.mxu0 0.0
    %441 = vmatpush.msra.mxu0 0.0
    %442 = vmatpush.msra.mxu0 0.0
    %443 = vmatpush.msra.mxu0 0.0
    %444 = vmatpush.msra.mxu0 0.0
    %445 = vmatpush.msra.mxu0 0.0
    %446 = vmatpush.msra.mxu0 0.0
    %447 = vmatpush.msra.mxu0 %v112
    %448 = vmatmul.f32.gmra.mxu0 %v427
    %v449 = vpop.f32.mrf.mxu0
    %v450 = vadd.f32 0.0, %v449
    %451 = vmatmul.f32.gmra.mxu0 %v430
    %v452 = vpop.f32.mrf.mxu0
    %v453 = vadd.f32 0.0, %v452
    %454 = vdwg.mxu0
    %v456 = vsel %vm118, %v242, 0
    %v459 = vsel %vm118, %v268, 0
    %461 = vmatpush.msra.mxu0 0.0
    %462 = vmatpush.msra.mxu0 0.0
    %463 = vmatpush.msra.mxu0 0.0
    %464 = vmatpush.msra.mxu0 0.0
    %465 = vmatpush.msra.mxu0 0.0
    %466 = vmatpush.msra.mxu0 0.0
    %467 = vmatpush.msra.mxu0 0.0
    %468 = vmatpush.msra.mxu0 0.0
    %469 = vmatpush.msra.mxu0 0.0
    %470 = vmatpush.msra.mxu0 0.0
    %471 = vmatpush.msra.mxu0 0.0
    %472 = vmatpush.msra.mxu0 0.0
    %473 = vmatpush.msra.mxu0 0.0
    %474 = vmatpush.msra.mxu0 0.0
    %475 = vmatpush.msra.mxu0 0.0
    %476 = vmatpush.msra.mxu0 %v111
    %477 = vmatmul.f32.gmra.mxu0 %v456
    %v478 = vpop.f32.mrf.mxu0
    %v479 = vadd.f32 %v450, %v478
    %480 = vmatmul.f32.gmra.mxu0 %v459
    %v481 = vpop.f32.mrf.mxu0
    %v482 = vadd.f32 %v453, %v481
    %483 = vdwg.mxu0
    %484 = vrot.lane.b32.xlu0 %v106, 112
    %v485 = vpop.permute.xlu0 %484
    %486 = vrot.lane.b32.xlu0 %v106, 80
    %v487 = vpop.permute.xlu0 %486
    %v488 = vsel %vm118, %v485, 0
    %v490 = vsel %vm118, %v487, 0
    %492 = vmatpush.xpose.msra.mxu0 0.0
    %493 = vmatpush.xpose.msra.mxu0 0.0
    %494 = vmatpush.xpose.msra.mxu0 0.0
    %495 = vmatpush.xpose.msra.mxu0 0.0
    %496 = vmatpush.xpose.msra.mxu0 0.0
    %497 = vmatpush.xpose.msra.mxu0 0.0
    %498 = vmatpush.xpose.msra.mxu0 0.0
    %499 = vmatpush.xpose.msra.mxu0 0.0
    %500 = vmatpush.xpose.msra.mxu0 0.0
    %501 = vmatpush.xpose.msra.mxu0 0.0
    %502 = vmatpush.xpose.msra.mxu0 0.0
    %503 = vmatpush.xpose.msra.mxu0 0.0
    %504 = vmatpush.xpose.msra.mxu0 0.0
    %505 = vmatpush.xpose.msra.mxu0 0.0
    %506 = vmatpush.xpose.msra.mxu0 0.0
    %507 = vmatpush.xpose.msra.mxu0 %v490
    %508 = vmatmul.f32.gmra.mxu0 %v488
    %v509 = vpop.f32.mrf.mxu0
    %v510 = vadd.f32 0.0, %v509
    %511 = vdwg.mxu0
    %512 = vrot.lane.b32.xlu0 %v109, 112
    %v513 = vpop.permute.xlu0 %512
    %514 = vrot.lane.b32.xlu0 %v109, 80
    %v515 = vpop.permute.xlu0 %514
    %v516 = vsel %vm118, %v513, 0
    %v518 = vsel %vm118, %v515, 0
    %520 = vmatpush.xpose.msra.mxu0 0.0
    %521 = vmatpush.xpose.msra.mxu0 0.0
    %522 = vmatpush.xpose.msra.mxu0 0.0
    %523 = vmatpush.xpose.msra.mxu0 0.0
    %524 = vmatpush.xpose.msra.mxu0 0.0
    %525 = vmatpush.xpose.msra.mxu0 0.0
    %526 = vmatpush.xpose.msra.mxu0 0.0
    %527 = vmatpush.xpose.msra.mxu0 0.0
    %528 = vmatpush.xpose.msra.mxu0 0.0
    %529 = vmatpush.xpose.msra.mxu0 0.0
    %530 = vmatpush.xpose.msra.mxu0 0.0
    %531 = vmatpush.xpose.msra.mxu0 0.0
    %532 = vmatpush.xpose.msra.mxu0 0.0
    %533 = vmatpush.xpose.msra.mxu0 0.0
    %534 = vmatpush.xpose.msra.mxu0 0.0
    %535 = vmatpush.xpose.msra.mxu0 %v518
    %536 = vmatmul.f32.gmra.mxu0 %v516
    %v537 = vpop.f32.mrf.mxu0
    %v538 = vadd.f32 0.0, %v537
    %539 = vdwg.mxu0
    %v540 = vsel %vm118, %v510, -inf
    %541 = vmax.xlane.f32.xlu0 %v540
    %v542 = vpop.xlane.xlu0 %541
    %v543 = vsel %vm118, %v538, -inf
    %544 = vmax.xlane.f32.xlu0 %v543
    %v545 = vpop.xlane.xlu0 %544
    %v546 = vsub.f32 %v510, %v542
    %v547 = vsub.f32 %v538, %v545
    %v548 = vmul.f32 %v546, 1.442695
    %v549 = vpow.pop %v548
    %v550 = vmul.f32 %v547, 1.442695
    %v551 = vpow.pop %v550
    %v552 = vsel %vm118, %v549, 0.0
    %553 = vadd.xlane.f32.xlu0 %v552
    %v554 = vpop.xlane.xlu0 %553
    %v555 = vsel %vm118, %v551, 0.0
    %556 = vadd.xlane.f32.xlu0 %v555
    %v557 = vpop.xlane.xlu0 %556
    %v558 = vrcp.pop %v554
    %v559 = vmul.f32 %v554, %v558
    %v560 = vsub.f32 1.0, %v559
    %v561 = vmul.f32 %v558, %v560
    %v562 = vadd.f32 %v558, %v561
    %vm563 = vweird.f32 %v554
    %vm564 = vweird.f32 %v558
    %vm565 = vmor %vm563, %vm564
    %v566 = vsel %vm565, %v558, %v562
    %v567 = vand.u32 2147483647, %v554
    %vm568 = vcmp.eq.f32.partialorder %v567, 8.507059e+37
    %v569 = vand.u32 %v554, 2147483648
    %v570 = vor.u32 1.1754944e-38, %v569
    %v571 = vsel %vm568, %v570, %v566
    %v572 = vrcp.pop %v557
    %v573 = vmul.f32 %v557, %v572
    %v574 = vsub.f32 1.0, %v573
    %v575 = vmul.f32 %v572, %v574
    %v576 = vadd.f32 %v572, %v575
    %vm577 = vweird.f32 %v557
    %vm578 = vweird.f32 %v572
    %vm579 = vmor %vm577, %vm578
    %v580 = vsel %vm579, %v572, %v576
    %v581 = vand.u32 2147483647, %v557
    %vm582 = vcmp.eq.f32.partialorder %v581, 8.507059e+37
    %v583 = vand.u32 %v557, 2147483648
    %v584 = vor.u32 1.1754944e-38, %v583
    %v585 = vsel %vm582, %v584, %v580
    %v586 = vmul.f32 %v549, %v571
    %v587 = vmul.f32 %v551, %v585
    %588 = vrot.lane.b32.xlu0 %v106, 48
    %v589 = vpop.permute.xlu0 %588
    %v592 = vsel %vm118, %v586, 0
    %594 = vmatpush.msra.mxu0 0.0
    %595 = vmatpush.msra.mxu0 0.0
    %596 = vmatpush.msra.mxu0 0.0
    %597 = vmatpush.msra.mxu0 0.0
    %598 = vmatpush.msra.mxu0 0.0
    %599 = vmatpush.msra.mxu0 0.0
    %600 = vmatpush.msra.mxu0 0.0
    %601 = vmatpush.msra.mxu0 0.0
    %602 = vmatpush.msra.mxu0 0.0
    %603 = vmatpush.msra.mxu0 0.0
    %604 = vmatpush.msra.mxu0 0.0
    %605 = vmatpush.msra.mxu0 0.0
    %606 = vmatpush.msra.mxu0 0.0
    %607 = vmatpush.msra.mxu0 0.0
    %608 = vmatpush.msra.mxu0 0.0
    %609 = vmatpush.msra.mxu0 %v589
    %610 = vmatmul.f32.gmra.mxu0 %v592
    %v611 = vpop.f32.mrf.mxu0
    %v612 = vadd.f32 0.0, %v611
    %613 = vdwg.mxu0
    %614 = vrot.lane.b32.xlu0 %v109, 48
    %v615 = vpop.permute.xlu0 %614
    %v618 = vsel %vm118, %v587, 0
    %620 = vmatpush.msra.mxu0 0.0
    %621 = vmatpush.msra.mxu0 0.0
    %622 = vmatpush.msra.mxu0 0.0
    %623 = vmatpush.msra.mxu0 0.0
    %624 = vmatpush.msra.mxu0 0.0
    %625 = vmatpush.msra.mxu0 0.0
    %626 = vmatpush.msra.mxu0 0.0
    %627 = vmatpush.msra.mxu0 0.0
    %628 = vmatpush.msra.mxu0 0.0
    %629 = vmatpush.msra.mxu0 0.0
    %630 = vmatpush.msra.mxu0 0.0
    %631 = vmatpush.msra.mxu0 0.0
    %632 = vmatpush.msra.mxu0 0.0
    %633 = vmatpush.msra.mxu0 0.0
    %634 = vmatpush.msra.mxu0 0.0
    %635 = vmatpush.msra.mxu0 %v615
    %636 = vmatmul.f32.gmra.mxu0 %v618
    %v637 = vpop.f32.mrf.mxu0
    %v638 = vadd.f32 0.0, %v637
    %639 = vdwg.mxu0
    %v641 = vsel %vm118, %v612, 0
    %v644 = vsel %vm118, %v638, 0
    %646 = vmatpush.msra.mxu0 0.0
    %647 = vmatpush.msra.mxu0 0.0
    %648 = vmatpush.msra.mxu0 0.0
    %649 = vmatpush.msra.mxu0 0.0
    %650 = vmatpush.msra.mxu0 0.0
    %651 = vmatpush.msra.mxu0 0.0
    %652 = vmatpush.msra.mxu0 0.0
    %653 = vmatpush.msra.mxu0 0.0
    %654 = vmatpush.msra.mxu0 0.0
    %655 = vmatpush.msra.mxu0 0.0
    %656 = vmatpush.msra.mxu0 0.0
    %657 = vmatpush.msra.mxu0 0.0
    %658 = vmatpush.msra.mxu0 0.0
    %659 = vmatpush.msra.mxu0 0.0
    %660 = vmatpush.msra.mxu0 0.0
    %661 = vmatpush.msra.mxu0 %v113
    %662 = vmatmul.f32.gmra.mxu0 %v641
    %v663 = vpop.f32.mrf.mxu0
    %v664 = vadd.f32 0.0, %v663
    %665 = vmatmul.f32.gmra.mxu0 %v644
    %v666 = vpop.f32.mrf.mxu0
    %v667 = vadd.f32 0.0, %v666
    %668 = vdwg.mxu0
    %v669 = vadd.f32 %v479, %v664
    %v670 = vadd.f32 %v482, %v667
    %671 = vrot.lane.b32.xlu0 %v106, 104
    %v672 = vpop.permute.xlu0 %671
    %673 = vrot.lane.b32.xlu0 %v106, 72
    %v674 = vpop.permute.xlu0 %673
    %v675 = vsel %vm118, %v672, 0
    %v677 = vsel %vm118, %v674, 0
    %679 = vmatpush.xpose.msra.mxu0 0.0
    %680 = vmatpush.xpose.msra.mxu0 0.0
    %681 = vmatpush.xpose.msra.mxu0 0.0
    %682 = vmatpush.xpose.msra.mxu0 0.0
    %683 = vmatpush.xpose.msra.mxu0 0.0
    %684 = vmatpush.xpose.msra.mxu0 0.0
    %685 = vmatpush.xpose.msra.mxu0 0.0
    %686 = vmatpush.xpose.msra.mxu0 0.0
    %687 = vmatpush.xpose.msra.mxu0 0.0
    %688 = vmatpush.xpose.msra.mxu0 0.0
    %689 = vmatpush.xpose.msra.mxu0 0.0
    %690 = vmatpush.xpose.msra.mxu0 0.0
    %691 = vmatpush.xpose.msra.mxu0 0.0
    %692 = vmatpush.xpose.msra.mxu0 0.0
    %693 = vmatpush.xpose.msra.mxu0 0.0
    %694 = vmatpush.xpose.msra.mxu0 %v677
    %695 = vmatmul.f32.gmra.mxu0 %v675
    %v696 = vpop.f32.mrf.mxu0
    %v697 = vadd.f32 0.0, %v696
    %698 = vdwg.mxu0
    %699 = vrot.lane.b32.xlu0 %v109, 104
    %v700 = vpop.permute.xlu0 %699
    %701 = vrot.lane.b32.xlu0 %v109, 72
    %v702 = vpop.permute.xlu0 %701
    %v703 = vsel %vm118, %v700, 0
    %v705 = vsel %vm118, %v702, 0
    %707 = vmatpush.xpose.msra.mxu0 0.0
    %708 = vmatpush.xpose.msra.mxu0 0.0
    %709 = vmatpush.xpose.msra.mxu0 0.0
    %710 = vmatpush.xpose.msra.mxu0 0.0
    %711 = vmatpush.xpose.msra.mxu0 0.0
    %712 = vmatpush.xpose.msra.mxu0 0.0
    %713 = vmatpush.xpose.msra.mxu0 0.0
    %714 = vmatpush.xpose.msra.mxu0 0.0
    %715 = vmatpush.xpose.msra.mxu0 0.0
    %716 = vmatpush.xpose.msra.mxu0 0.0
    %717 = vmatpush.xpose.msra.mxu0 0.0
    %718 = vmatpush.xpose.msra.mxu0 0.0
    %719 = vmatpush.xpose.msra.mxu0 0.0
    %720 = vmatpush.xpose.msra.mxu0 0.0
    %721 = vmatpush.xpose.msra.mxu0 0.0
    %722 = vmatpush.xpose.msra.mxu0 %v705
    %723 = vmatmul.f32.gmra.mxu0 %v703
    %v724 = vpop.f32.mrf.mxu0
    %v725 = vadd.f32 0.0, %v724
    %726 = vdwg.mxu0
    %v727 = vsel %vm118, %v697, -inf
    %728 = vmax.xlane.f32.xlu0 %v727
    %v729 = vpop.xlane.xlu0 %728
    %v730 = vsel %vm118, %v725, -inf
    %731 = vmax.xlane.f32.xlu0 %v730
    %v732 = vpop.xlane.xlu0 %731
    %v733 = vsub.f32 %v697, %v729
    %v734 = vsub.f32 %v725, %v732
    %v735 = vmul.f32 %v733, 1.442695
    %v736 = vpow.pop %v735
    %v737 = vmul.f32 %v734, 1.442695
    %v738 = vpow.pop %v737
    %v739 = vsel %vm118, %v736, 0.0
    %740 = vadd.xlane.f32.xlu0 %v739
    %v741 = vpop.xlane.xlu0 %740
    %v742 = vsel %vm118, %v738, 0.0
    %743 = vadd.xlane.f32.xlu0 %v742
    %v744 = vpop.xlane.xlu0 %743
    %v745 = vrcp.pop %v741
    %v746 = vmul.f32 %v741, %v745
    %v747 = vsub.f32 1.0, %v746
    %v748 = vmul.f32 %v745, %v747
    %v749 = vadd.f32 %v745, %v748
    %vm750 = vweird.f32 %v741
    %vm751 = vweird.f32 %v745
    %vm752 = vmor %vm750, %vm751
    %v753 = vsel %vm752, %v745, %v749
    %v754 = vand.u32 2147483647, %v741
    %vm755 = vcmp.eq.f32.partialorder %v754, 8.507059e+37
    %v756 = vand.u32 %v741, 2147483648
    %v757 = vor.u32 1.1754944e-38, %v756
    %v758 = vsel %vm755, %v757, %v753
    %v759 = vrcp.pop %v744
    %v760 = vmul.f32 %v744, %v759
    %v761 = vsub.f32 1.0, %v760
    %v762 = vmul.f32 %v759, %v761
    %v763 = vadd.f32 %v759, %v762
    %vm764 = vweird.f32 %v744
    %vm765 = vweird.f32 %v759
    %vm766 = vmor %vm764, %vm765
    %v767 = vsel %vm766, %v759, %v763
    %v768 = vand.u32 2147483647, %v744
    %vm769 = vcmp.eq.f32.partialorder %v768, 8.507059e+37
    %v770 = vand.u32 %v744, 2147483648
    %v771 = vor.u32 1.1754944e-38, %v770
    %v772 = vsel %vm769, %v771, %v767
    %v773 = vmul.f32 %v736, %v758
    %v774 = vmul.f32 %v738, %v772
    %775 = vrot.lane.b32.xlu0 %v106, 40
    %v776 = vpop.permute.xlu0 %775
    %v779 = vsel %vm118, %v773, 0
    %781 = vmatpush.msra.mxu0 0.0
    %782 = vmatpush.msra.mxu0 0.0
    %783 = vmatpush.msra.mxu0 0.0
    %784 = vmatpush.msra.mxu0 0.0
    %785 = vmatpush.msra.mxu0 0.0
    %786 = vmatpush.msra.mxu0 0.0
    %787 = vmatpush.msra.mxu0 0.0
    %788 = vmatpush.msra.mxu0 0.0
    %789 = vmatpush.msra.mxu0 0.0
    %790 = vmatpush.msra.mxu0 0.0
    %791 = vmatpush.msra.mxu0 0.0
    %792 = vmatpush.msra.mxu0 0.0
    %793 = vmatpush.msra.mxu0 0.0
    %794 = vmatpush.msra.mxu0 0.0
    %795 = vmatpush.msra.mxu0 0.0
    %796 = vmatpush.msra.mxu0 %v776
    %797 = vmatmul.f32.gmra.mxu0 %v779
    %v798 = vpop.f32.mrf.mxu0
    %v799 = vadd.f32 0.0, %v798
    %800 = vdwg.mxu0
    %801 = vrot.lane.b32.xlu0 %v109, 40
    %v802 = vpop.permute.xlu0 %801
    %v805 = vsel %vm118, %v774, 0
    %807 = vmatpush.msra.mxu0 0.0
    %808 = vmatpush.msra.mxu0 0.0
    %809 = vmatpush.msra.mxu0 0.0
    %810 = vmatpush.msra.mxu0 0.0
    %811 = vmatpush.msra.mxu0 0.0
    %812 = vmatpush.msra.mxu0 0.0
    %813 = vmatpush.msra.mxu0 0.0
    %814 = vmatpush.msra.mxu0 0.0
    %815 = vmatpush.msra.mxu0 0.0
    %816 = vmatpush.msra.mxu0 0.0
    %817 = vmatpush.msra.mxu0 0.0
    %818 = vmatpush.msra.mxu0 0.0
    %819 = vmatpush.msra.mxu0 0.0
    %820 = vmatpush.msra.mxu0 0.0
    %821 = vmatpush.msra.mxu0 0.0
    %822 = vmatpush.msra.mxu0 %v802
    %823 = vmatmul.f32.gmra.mxu0 %v805
    %v824 = vpop.f32.mrf.mxu0
    %v825 = vadd.f32 0.0, %v824
    %826 = vdwg.mxu0
    %v828 = vsel %vm118, %v799, 0
    %v831 = vsel %vm118, %v825, 0
    %833 = vmatpush.msra.mxu0 0.0
    %834 = vmatpush.msra.mxu0 0.0
    %835 = vmatpush.msra.mxu0 0.0
    %836 = vmatpush.msra.mxu0 0.0
    %837 = vmatpush.msra.mxu0 0.0
    %838 = vmatpush.msra.mxu0 0.0
    %839 = vmatpush.msra.mxu0 0.0
    %840 = vmatpush.msra.mxu0 0.0
    %841 = vmatpush.msra.mxu0 0.0
    %842 = vmatpush.msra.mxu0 0.0
    %843 = vmatpush.msra.mxu0 0.0
    %844 = vmatpush.msra.mxu0 0.0
    %845 = vmatpush.msra.mxu0 0.0
    %846 = vmatpush.msra.mxu0 0.0
    %847 = vmatpush.msra.mxu0 0.0
    %848 = vmatpush.msra.mxu0 %v114
    %849 = vmatmul.f32.gmra.mxu0 %v828
    %v850 = vpop.f32.mrf.mxu0
    %v851 = vadd.f32 0.0, %v850
    %852 = vmatmul.f32.gmra.mxu0 %v831
    %v853 = vpop.f32.mrf.mxu0
    %v854 = vadd.f32 0.0, %v853
    %855 = vdwg.mxu0
    %v856 = vadd.f32 %v669, %v851
    %v857 = vadd.f32 %v670, %v854
    %v858 = vperm.slane %v71, 2
    %v859 = vadd.f32 %v856, %v858
    %v860 = vadd.f32 %v857, %v858
    %v861 = vadd.f32 %v69, %v859
    %v862 = vadd.f32 %v70, %v860
    %vm863 = vcmask 261120
    %v864 = vsel %vm863, %v861, 0.0
    %865 = vadd.xlane.f32.xlu0 %v864
    %v866 = vpop.xlane.xlu0 %865
    %v867 = vsel %vm863, %v862, 0.0
    %868 = vadd.xlane.f32.xlu0 %v867
    %v869 = vpop.xlane.xlu0 %868
    %v870 = vrcp.pop 32.0
    %v871 = vmul.f32 32.0, %v870
    %v872 = vsub.f32 1.0, %v871
    %v873 = vmul.f32 %v870, %v872
    %v874 = vadd.f32 %v870, %v873
    %vm875 = vweird.f32 %v870
    %v876 = vsel %vm875, %v870, %v874
    %v877 = vmul.f32 %v866, %v876
    %v878 = vmul.f32 %v869, %v876
    %v879 = vsub.f32 %v861, %v877
    %v880 = vsub.f32 %v862, %v878
    %v881 = vmul.f32 %v879, %v879
    %v882 = vmul.f32 %v880, %v880
    %v883 = vsel %vm863, %v881, 0.0
    %884 = vadd.xlane.f32.xlu0 %v883
    %v885 = vpop.xlane.xlu0 %884
    %v886 = vsel %vm863, %v882, 0.0
    %887 = vadd.xlane.f32.xlu0 %v886
    %v888 = vpop.xlane.xlu0 %887
    %v889 = vmul.f32 %v885, %v876
    %v890 = vmul.f32 %v888, %v876
    %v891 = vadd.f32 %v889, 1e-05
    %v892 = vadd.f32 %v890, 1e-05
    %v893 = vrsqrt.pop %v891
    %v894 = vmul.f32 %v893, %v891
    %v895 = vmul.f32 %v894, %v893
    %v896 = vmul.f32 0.5, %v895
    %v897 = vsub.f32 1.5, %v896
    %v898 = vmul.f32 %v893, %v897
    %vm899 = vweird.f32 %v891
    %vm900 = vweird.f32 %v893
    %vm901 = vmor %vm899, %vm900
    %v902 = vsel %vm901, %v893, %v898
    %v903 = vrsqrt.pop %v892
    %v904 = vmul.f32 %v903, %v892
    %v905 = vmul.f32 %v904, %v903
    %v906 = vmul.f32 0.5, %v905
    %v907 = vsub.f32 1.5, %v906
    %v908 = vmul.f32 %v903, %v907
    %vm909 = vweird.f32 %v892
    %vm910 = vweird.f32 %v903
    %vm911 = vmor %vm909, %vm910
    %v912 = vsel %vm911, %v903, %v908
    %v913 = vmul.f32 %v879, %v902
    %v914 = vmul.f32 %v880, %v912
    %v915 = vperm.slane %v71, 4
    %v916 = vmul.f32 %v913, %v915
    %v917 = vmul.f32 %v914, %v915
    %v918 = vperm.slane %v71, 5
    %v919 = vadd.f32 %v916, %v918
    %v920 = vadd.f32 %v917, %v918
    %v921 = vld [vmem:[#allocation5] sm:$0xff]
    %v922 = vld [vmem:[#allocation5 + $0x8] sm:$0xff]
    %v923 = vld [vmem:[#allocation5 + $0x10] sm:$0xff]
    %v924 = vld [vmem:[#allocation5 + $0x18] sm:$0xff]
    %v925 = vperm.slane %v71, 1
    %v927 = vsel %vm863, %v919, 0
    %v930 = vsel %vm863, %v920, 0
    %932 = vmatpush.msra.mxu0 0.0
    %933 = vmatpush.msra.mxu0 0.0
    %934 = vmatpush.msra.mxu0 0.0
    %935 = vmatpush.msra.mxu0 0.0
    %936 = vmatpush.msra.mxu0 0.0
    %937 = vmatpush.msra.mxu0 0.0
    %938 = vmatpush.msra.mxu0 0.0
    %939 = vmatpush.msra.mxu0 0.0
    %940 = vmatpush.msra.mxu0 0.0
    %941 = vmatpush.msra.mxu0 0.0
    %942 = vmatpush.msra.mxu0 0.0
    %943 = vmatpush.msra.mxu0 0.0
    %944 = vmatpush.msra.mxu0 %v924
    %945 = vmatpush.msra.mxu0 %v923
    %946 = vmatpush.msra.mxu0 %v922
    %947 = vmatpush.msra.mxu0 %v921
    %948 = vmatmul.f32.gmra.mxu0 %v927
    %v949 = vpop.f32.mrf.mxu0
    %v950 = vadd.f32 %v925, %v949
    %951 = vmatmul.f32.gmra.mxu0 %v930
    %v952 = vpop.f32.mrf.mxu0
    %v953 = vadd.f32 %v925, %v952
    %954 = vdwg.mxu0
    %v955 = vmul.f32 %v950, 0.5
    %v956 = vmul.f32 %v953, 0.5
    %v957 = vrcp.pop 1.4142135
    %v958 = vmul.f32 1.4142135, %v957
    %v959 = vsub.f32 1.0, %v958
    %v960 = vmul.f32 %v957, %v959
    %v961 = vadd.f32 %v957, %v960
    %vm962 = vweird.f32 %v957
    %v963 = vsel %vm962, %v957, %v961
    %v964 = vmul.f32 %v950, %v963
    %v965 = vmul.f32 %v953, %v963
    %v966 = vmul.f32 %v964, %v964
    %v967 = vmin.f32 16.0, %v966
    %v968 = vmul.f32 %v967, 2.1237322e-06
    %v969 = vadd.f32 %v968, 0.00028619796
    %v970 = vmul.f32 %v967, %v969
    %v971 = vadd.f32 %v970, 0.0036580483
    %v972 = vmul.f32 %v967, %v971
    %v973 = vadd.f32 %v972, 0.05243302
    %v974 = vmul.f32 %v967, %v973
    %v975 = vadd.f32 %v974, 0.18741608
    %v976 = vmul.f32 %v967, %v975
    %v977 = vadd.f32 %v976, 1.1283791
    %v978 = vmul.f32 %v964, %v977
    %v979 = vmul.f32 %v967, 3.8918573e-05
    %v980 = vadd.f32 %v979, 0.001143296
    %v981 = vmul.f32 %v967, %v980
    %v982 = vadd.f32 %v981, 0.014752088
    %v983 = vmul.f32 %v967, %v982
    %v984 = vadd.f32 %v983, 0.112945676
    %v985 = vmul.f32 %v967, %v984
    %v986 = vadd.f32 %v985, 0.4994258
    %v987 = vmul.f32 %v967, %v986
    %v988 = vadd.f32 %v987, 1.0
    %v989 = vrcp.pop %v988
    %v990 = vmul.f32 %v988, %v989
    %v991 = vsub.f32 1.0, %v990
    %v992 = vmul.f32 %v989, %v991
    %v993 = vadd.f32 %v989, %v992
    %vm994 = vweird.f32 %v988
    %vm995 = vweird.f32 %v989
    %vm996 = vmor %vm994, %vm995
    %v997 = vsel %vm996, %v989, %v993
    %v998 = vand.u32 2147483647, %v988
    %vm999 = vcmp.eq.f32.partialorder %v998, 8.507059e+37
    %v1000 = vand.u32 %v988, 2147483648
    %v1001 = vor.u32 1.1754944e-38, %v1000
    %v1002 = vsel %vm999, %v1001, %v997
    %v1003 = vmul.f32 %v978, %v1002
    %v1004 = vmin.f32 %v1003, 1.0
    %v1005 = vmax.f32 %v1004, -1.0
    %v1006 = vmul.f32 %v965, %v965
    %v1007 = vmin.f32 16.0, %v1006
    %v1008 = vmul.f32 %v1007, 2.1237322e-06
    %v1009 = vadd.f32 %v1008, 0.00028619796
    %v1010 = vmul.f32 %v1007, %v1009
    %v1011 = vadd.f32 %v1010, 0.0036580483
    %v1012 = vmul.f32 %v1007, %v1011
    %v1013 = vadd.f32 %v1012, 0.05243302
    %v1014 = vmul.f32 %v1007, %v1013
    %v1015 = vadd.f32 %v1014, 0.18741608
    %v1016 = vmul.f32 %v1007, %v1015
    %v1017 = vadd.f32 %v1016, 1.1283791
    %v1018 = vmul.f32 %v965, %v1017
    %v1019 = vmul.f32 %v1007, 3.8918573e-05
    %v1020 = vadd.f32 %v1019, 0.001143296
    %v1021 = vmul.f32 %v1007, %v1020
    %v1022 = vadd.f32 %v1021, 0.014752088
    %v1023 = vmul.f32 %v1007, %v1022
    %v1024 = vadd.f32 %v1023, 0.112945676
    %v1025 = vmul.f32 %v1007, %v1024
    %v1026 = vadd.f32 %v1025, 0.4994258
    %v1027 = vmul.f32 %v1007, %v1026
    %v1028 = vadd.f32 %v1027, 1.0
    %v1029 = vrcp.pop %v1028
    %v1030 = vmul.f32 %v1028, %v1029
    %v1031 = vsub.f32 1.0, %v1030
    %v1032 = vmul.f32 %v1029, %v1031
    %v1033 = vadd.f32 %v1029, %v1032
    %vm1034 = vweird.f32 %v1028
    %vm1035 = vweird.f32 %v1029
    %vm1036 = vmor %vm1034, %vm1035
    %v1037 = vsel %vm1036, %v1029, %v1033
    %v1038 = vand.u32 2147483647, %v1028
    %vm1039 = vcmp.eq.f32.partialorder %v1038, 8.507059e+37
    %v1040 = vand.u32 %v1028, 2147483648
    %v1041 = vor.u32 1.1754944e-38, %v1040
    %v1042 = vsel %vm1039, %v1041, %v1037
    %v1043 = vmul.f32 %v1018, %v1042
    %v1044 = vmin.f32 %v1043, 1.0
    %v1045 = vmax.f32 %v1044, -1.0
    %v1046 = vadd.f32 %v1005, 1.0
    %v1047 = vadd.f32 %v1045, 1.0
    %v1048 = vmul.f32 %v955, %v1046
    %v1049 = vmul.f32 %v956, %v1047
    %v1050 = vld [vmem:[%s4] sm:$0xff]
    %v1051 = vld [vmem:[%s4 + $0x8] sm:$0xff]
    %v1052 = vld [vmem:[%s4 + $0x10] sm:$0xff]
    %v1053 = vld [vmem:[%s4 + $0x18] sm:$0xff]
    %v1054 = vld [vmem:[%s4 + $0x20] sm:$0xff]
    %v1055 = vld [vmem:[%s4 + $0x28] sm:$0xff]
    %v1056 = vld [vmem:[%s4 + $0x30] sm:$0xff]
    %v1057 = vld [vmem:[%s4 + $0x38] sm:$0xff]
    %v1058 = vperm.slane %v71, 3
    %v1060 = vsel %vm81, %v1048, 0
    %v1063 = vsel %vm81, %v1049, 0
    %1065 = vmatpush.msra.mxu0 0.0
    %1066 = vmatpush.msra.mxu0 0.0
    %1067 = vmatpush.msra.mxu0 0.0
    %1068 = vmatpush.msra.mxu0 0.0
    %1069 = vmatpush.msra.mxu0 0.0
    %1070 = vmatpush.msra.mxu0 0.0
    %1071 = vmatpush.msra.mxu0 0.0
    %1072 = vmatpush.msra.mxu0 0.0
    %1073 = vmatpush.msra.mxu0 %v1057
    %1074 = vmatpush.msra.mxu0 %v1056
    %1075 = vmatpush.msra.mxu0 %v1055
    %1076 = vmatpush.msra.mxu0 %v1054
    %1077 = vmatpush.msra.mxu0 %v1053
    %1078 = vmatpush.msra.mxu0 %v1052
    %1079 = vmatpush.msra.mxu0 %v1051
    %1080 = vmatpush.msra.mxu0 %v1050
    %1081 = vmatmul.f32.gmra.mxu0 %v1060
    %v1082 = vpop.f32.mrf.mxu0
    %v1083 = vadd.f32 %v1058, %v1082
    %1084 = vmatmul.f32.gmra.mxu0 %v1063
    %v1085 = vpop.f32.mrf.mxu0
    %v1086 = vadd.f32 %v1058, %v1085
    %1087 = vdwg.mxu0
    %v1088 = vadd.f32 %v919, %v1083
    %v1089 = vadd.f32 %v920, %v1086
    %v1090 = vsel %vm863, %v1088, 0.0
    %1091 = vadd.xlane.f32.xlu0 %v1090
    %v1092 = vpop.xlane.xlu0 %1091
    %v1093 = vsel %vm863, %v1089, 0.0
    %1094 = vadd.xlane.f32.xlu0 %v1093
    %v1095 = vpop.xlane.xlu0 %1094
    %v1096 = vmul.f32 %v1092, %v876
    %v1097 = vmul.f32 %v1095, %v876
    %v1098 = vsub.f32 %v1088, %v1096
    %v1099 = vsub.f32 %v1089, %v1097
    %v1100 = vmul.f32 %v1098, %v1098
    %v1101 = vmul.f32 %v1099, %v1099
    %v1102 = vsel %vm863, %v1100, 0.0
    %1103 = vadd.xlane.f32.xlu0 %v1102
    %v1104 = vpop.xlane.xlu0 %1103
    %v1105 = vsel %vm863, %v1101, 0.0
    %1106 = vadd.xlane.f32.xlu0 %v1105
    %v1107 = vpop.xlane.xlu0 %1106
    %v1108 = vmul.f32 %v1104, %v876
    %v1109 = vmul.f32 %v1107, %v876
    %v1110 = vadd.f32 %v1108, 1e-05
    %v1111 = vadd.f32 %v1109, 1e-05
    %v1112 = vrsqrt.pop %v1110
    %v1113 = vmul.f32 %v1112, %v1110
    %v1114 = vmul.f32 %v1113, %v1112
    %v1115 = vmul.f32 0.5, %v1114
    %v1116 = vsub.f32 1.5, %v1115
    %v1117 = vmul.f32 %v1112, %v1116
    %vm1118 = vweird.f32 %v1110
    %vm1119 = vweird.f32 %v1112
    %vm1120 = vmor %vm1118, %vm1119
    %v1121 = vsel %vm1120, %v1112, %v1117
    %v1122 = vrsqrt.pop %v1111
    %v1123 = vmul.f32 %v1122, %v1111
    %v1124 = vmul.f32 %v1123, %v1122
    %v1125 = vmul.f32 0.5, %v1124
    %v1126 = vsub.f32 1.5, %v1125
    %v1127 = vmul.f32 %v1122, %v1126
    %vm1128 = vweird.f32 %v1111
    %vm1129 = vweird.f32 %v1122
    %vm1130 = vmor %vm1128, %vm1129
    %v1131 = vsel %vm1130, %v1122, %v1127
    %v1132 = vmul.f32 %v1098, %v1121
    %v1133 = vmul.f32 %v1099, %v1131
    %v1134 = vperm.slane %v71, 6
    %v1135 = vmul.f32 %v1132, %v1134
    %v1136 = vmul.f32 %v1133, %v1134
    %v1137 = vperm.slane %v71, 7
    %v1138 = vadd.f32 %v1135, %v1137
    %v1139 = vadd.f32 %v1136, %v1137
    %1140 = vst.msk [vmem:[#allocation8] sm:$0xff] %vm863, %v1138
    %1141 = vst.msk [vmem:[#allocation8 + $0x8] sm:$0xff] %vm863, %v1139
    // Predicated region
    $region38: #{tpu_custom_call.1} parent=1 // pred_check
      _
    $region39: #{tpu_custom_call.1} parent=1 // pred_check_branch
      %1143 = sbr.rel (0) target = $region41
    $region40: #{tpu_custom_call.1} parent=1 // pred_region
      %1145 = vsyncadd [#allocation4], 0
      %s1146 = sshll.u32 [#allocation8], 4
      %s1147 = int_to_ptr.vmem [resolvable:$true] %s1146
      %s1148 = sshll.u32 %s6, 4
      %s1149 = int_to_ptr.hbm [resolvable:$true] %s1148
      %1154 = dma.vmem_to_hbm [thread:$0]  %s1147, 256, %s1149, [#allocation4], 128, 128, 8
    $region41: #{tpu_custom_call.1} parent=1 // pred_fallthru
      _
    // Predicated region
    $region42: #{tpu_custom_call.1} parent=1 // pred_check
      _
    $region43: #{tpu_custom_call.1} parent=1 // pred_check_branch
      %1156 = sbr.rel (0) target = $region45
    $region44: #{tpu_custom_call.1} parent=1 // pred_region
      %1158 = dma.done [#allocation4], 256
    $region45: #{tpu_custom_call.1} parent=1 // pred_fallthru
      _
    %1159 = vsyncpa [#allocation3], 1
    %1160 = vsyncpa [#allocation6], 1
    %1161 = vsyncpa [#allocation4], 1

</llo_original>
